<compile_context>
chip_gen: v6e
topology: v6e:2x2x1
jax: 0.10.0
libtpu: 0.0.40
codegen_flags: <defaults>
</compile_context>

<pallas_src>
import functools
import math

import numpy as np
import jax
import jax.numpy as jnp
from jax.experimental import pallas as pl
from jax.experimental.pallas import tpu as pltpu

# ----------------- config (small but structurally faithful) -----------------
NODE_DIM = 64        # node_feat_dim (640 in reference, scaled down)
PAIR_DIM = 16        # pair_feat_dim (64 in reference, scaled down)
NUM_LAYERS = 2       # num_layers   (3 in reference)
NUM_HEADS = 4
QK_DIM = 8
V_DIM = 8
N_QPOINTS = 4
N_VPOINTS = 4
MAX_AA = 22
MAX_RELPOS = 32
NUM_ATOMS = 4        # max_num_atoms
OUTPUT_DIM = 1

ROW_TILE = 512         # row tile for node-width (64..256 lane) linears / MLPs
PAIR_ROW_TILE = 4096   # row tile for the 16-lane pair-feature kernel (launch-overhead bound)


def _default_vmem_limit():
    # generation-aware scoped-VMEM limit: <= 3/4 of physical VMEM, capped at 64 MiB
    # (respects v7x's 64 MiB while giving v5e/v6e headroom over the 16/32 MiB default).
    try:
        cap = getattr(pltpu.get_tpu_info(), "vmem_capacity_bytes", None)
        if cap:
            return int(min(64 * 1024 * 1024, cap * 3 // 4))
    except Exception:
        pass
    return 32 * 1024 * 1024


VMEM_LIMIT = _default_vmem_limit()


def _mosaic(dims):
    return pltpu.CompilerParams(dimension_semantics=dims, vmem_limit_bytes=VMEM_LIMIT)


def _row_tile(m, tile=ROW_TILE):
    return m if m <= tile else tile


# ============================ row-tiled linear / MLP kernels ============================

def _linear_kernel(x_ref, w_ref, b_ref, o_ref, *, relu, bf16):
    x = x_ref[...]
    w = w_ref[...]
    if bf16:
        x = x.astype(jnp.bfloat16)
        w = w.astype(jnp.bfloat16)
    y = jnp.dot(x, w, preferred_element_type=jnp.float32) + b_ref[...]
    if relu:
        y = jnp.maximum(y, 0.0)
    o_ref[...] = y


def pallas_linear2d(x2d, w, b, relu=False, bf16=False):
    m, k = x2d.shape
    n = w.shape[1]
    tm = _row_tile(m)
    return pl.pallas_call(
        functools.partial(_linear_kernel, relu=relu, bf16=bf16),
        grid=(pl.cdiv(m, tm),),
        in_specs=[pl.BlockSpec((tm, k), lambda i: (i, 0)),
                  pl.BlockSpec((k, n), lambda i: (0, 0)),
                  pl.BlockSpec((1, n), lambda i: (0, 0))],
        out_specs=pl.BlockSpec((tm, n), lambda i: (i, 0)),
        out_shape=jax.ShapeDtypeStruct((m, n), jnp.float32),
        compiler_params=_mosaic(("parallel",)),
    )(x2d, w, b.reshape(1, n))


def linear(x, w, b, relu=False, bf16=False):
    lead = x.shape[:-1]
    y = pallas_linear2d(x.reshape(-1, x.shape[-1]), w, b, relu=relu, bf16=bf16)
    return y.reshape(*lead, w.shape[1])


def _mlp3_kernel(x_ref, w1_ref, b1_ref, w2_ref, b2_ref, w3_ref, b3_ref, o_ref,
                 *, relus, bf16):
    def layer(h, w_ref, b_ref, relu):
        w = w_ref[...]
        if bf16:
            h = h.astype(jnp.bfloat16)
            w = w.astype(jnp.bfloat16)
        y = jnp.dot(h, w, preferred_element_type=jnp.float32) + b_ref[...]
        return jnp.maximum(y, 0.0) if relu else y

    h = layer(x_ref[...], w1_ref, b1_ref, relus[0])
    h = layer(h, w2_ref, b2_ref, relus[1])
    o_ref[...] = layer(h, w3_ref, b3_ref, relus[2])


def pallas_mlp3(x, w1, b1, w2, b2, w3, b3, relus=(True, True, False), bf16=False):
    lead = x.shape[:-1]
    x2 = x.reshape(-1, x.shape[-1])
    m, k = x2.shape
    tm = _row_tile(m)
    n_out = w3.shape[1]
    in_specs = [pl.BlockSpec((tm, k), lambda i: (i, 0))]
    operands = [x2]
    for w, b in ((w1, b1), (w2, b2), (w3, b3)):
        nb = w.shape[1]
        in_specs += [pl.BlockSpec(w.shape, lambda i: (0, 0)),
                     pl.BlockSpec((1, nb), lambda i: (0, 0))]
        operands += [w, b.reshape(1, nb)]
    y = pl.pallas_call(
        functools.partial(_mlp3_kernel, relus=relus, bf16=bf16),
        grid=(pl.cdiv(m, tm),),
        in_specs=in_specs,
        out_specs=pl.BlockSpec((tm, n_out), lambda i: (i, 0)),
        out_shape=jax.ShapeDtypeStruct((m, n_out), jnp.float32),
        compiler_params=_mosaic(("parallel",)),
    )(*operands)
    return y.reshape(*lead, n_out)


# ============================ fused pair-feature kernel ============================
# gaussian(d2) -> 2-layer dist MLP -> + base(aapair+relpos) -> 3-layer pair MLP -> * mask,
# all in one row-tiled pass; emits bf16 so the dominant B*L^2 tensor is half-width in HBM.

def _pair_mlp_kernel(d2_ref, c_ref, m_ref, base_ref, mask_ref,
                     wd1, bd1, wd2, bd2, wp1, bp1, wp2, bp2, wp3, bp3, o_ref):
    g = jnp.exp(-c_ref[...] * d2_ref[...]) * m_ref[...]

    def layer(h, w_ref, b_ref, relu=True):
        y = jnp.dot(h.astype(jnp.bfloat16), w_ref[...].astype(jnp.bfloat16),
                    preferred_element_type=jnp.float32) + b_ref[...]
        return jnp.maximum(y, 0.0) if relu else y

    h = layer(g, wd1, bd1)
    h = layer(h, wd2, bd2)
    h = h + base_ref[...]
    h = layer(h, wp1, bp1)
    h = layer(h, wp2, bp2)
    h = layer(h, wp3, bp3, relu=False)
    o_ref[...] = (h * mask_ref[...]).astype(o_ref.dtype)


def pallas_pair_mlp(d2, c, m_ap, base, mask2d, p):
    lead = d2.shape[:-1]
    k = d2.shape[-1]
    dz = p['w_p3'].shape[1]
    rows = int(np.prod(lead))
    tm = _row_tile(rows, PAIR_ROW_TILE)
    weights = [p['w_d1'], p['b_d1'].reshape(1, -1), p['w_d2'], p['b_d2'].reshape(1, -1),
               p['w_p1'], p['b_p1'].reshape(1, -1), p['w_p2'], p['b_p2'].reshape(1, -1),
               p['w_p3'], p['b_p3'].reshape(1, -1)]

    def row(width):
        return pl.BlockSpec((tm, width), lambda i: (i, 0))

    y = pl.pallas_call(
        _pair_mlp_kernel,
        grid=(pl.cdiv(rows, tm),),
        in_specs=[row(k), row(k), row(k), row(dz), row(1)]
                 + [pl.BlockSpec(w.shape, lambda i: (0, 0)) for w in weights],
        out_specs=row(dz),
        out_shape=jax.ShapeDtypeStruct((rows, dz), jnp.bfloat16),
        compiler_params=_mosaic(("parallel",)),
    )(d2.reshape(rows, k), c.reshape(rows, k), m_ap.reshape(rows, k),
      base.reshape(rows, dz), mask2d.reshape(rows, 1), *weights)
    return y.reshape(*lead, dz)


# ============================ IPA attention kernel ============================

def _ga_attn_kernel(qc_ref, kcT_ref, v_ref, vp_ref, z_ref, wzb_ref,
                    mrow_ref, mcol_ref, r_ref, t_ref, o_ref,
                    *, num_heads, v_dim, n_vp, pair_dim, w_pad, out_pad):
    H, Cv, Pv, Dz, W = num_heads, v_dim, n_vp, pair_dim, w_pad
    TQ = qc_ref.shape[1]
    L = v_ref.shape[1]

    qc = qc_ref[0]                          # (TQ, H*W) bf16, scales folded on q-side
    kcT = kcT_ref[0]                        # (H*W, L) bf16, pre-transposed in wrapper
    vall = v_ref[0]                         # (L, H*Cv) bf16
    vpall = vp_ref[0]                       # (L, H*3Pv) bf16, per head [x*Pv|y*Pv|z*Pv]
    z3 = z_ref[0]                           # (TQ, L, Dz) bf16
    mrow = mrow_ref[0]                      # (TQ, 1) f32 query-row mask
    mbias = (mcol_ref[0] - 1.0) * 1e5       # (1, L): 0 for valid keys, -1e5 for masked
    t = t_ref[0]                            # (TQ, 3)
    r = r_ref[0]                            # (TQ, 9), row-major R[a,b] = r[:, 3a+b]

    # pair-bias logits for ALL heads with ONE MXU pass over the resident z tile
    # (1/sqrt(3) is folded into wzb in the wrapper; bzb cancels in softmax).
    zb_all = jnp.dot(z3.reshape(TQ * L, Dz), wzb_ref[...],
                     preferred_element_type=jnp.float32).reshape(TQ, L, H)

    pair_parts, node_parts, spatial_parts = [], [], []
    for h in range(H):
        # node logit + full spatial logit g*(||qp||^2 - 2 qp.kp + ||kp||^2) as one MXU
        # contraction over the precomputed combined operands (no in-kernel concat/transpose).
        logits = jnp.dot(qc[:, h * W:(h + 1) * W], kcT[h * W:(h + 1) * W, :],
                         preferred_element_type=jnp.float32)
        logits = logits + zb_all[:, :, h] + mbias

        lmax = jnp.max(logits, axis=-1, keepdims=True)
        p = jnp.exp(logits - lmax)
        denom = jnp.sum(p, axis=-1, keepdims=True)
        # deferred softmax normalization + query-row masking: scale only the small
        # aggregated results, never the (TQ, L) weights.
        scale = mrow / denom                                   # (TQ, 1), exact reciprocal
        p_b = p.astype(jnp.bfloat16)                           # p in (0, 1], safe for bf16

        node_parts.append(
            jnp.dot(p_b, vall[:, h * Cv:(h + 1) * Cv],
                    preferred_element_type=jnp.float32) * scale)

        # pair -> node aggregation per head on the resident z tile (VPU multiply+reduce;
        # avoids jnp.stack + pathological batched einsum).
        pair_parts.append(
            jnp.sum((p_b[:, :, None] * z3).astype(jnp.float32), axis=1) * scale)

        # spatial aggregation (global frame), global -> local, then dist / direction
        aggr = jnp.dot(p_b, vpall[:, h * 3 * Pv:(h + 1) * 3 * Pv],
                       preferred_element_type=jnp.float32) * scale
        gx = aggr[:, 0:Pv] - t[:, 0:1]
        gy = aggr[:, Pv:2 * Pv] - t[:, 1:2]
        gz = aggr[:, 2 * Pv:3 * Pv] - t[:, 2:3]
        # local = R^T (p - t); local_b = sum_a R[a,b] * p_a
        lx = r[:, 0:1] * gx + r[:, 3:4] * gy + r[:, 6:7] * gz
        ly = r[:, 1:2] * gx + r[:, 4:5] * gy + r[:, 7:8] * gz
        lz = r[:, 2:3] * gx + r[:, 5:6] * gy + r[:, 8:9] * gz
        dist = jnp.sqrt(lx * lx + ly * ly + lz * lz)
        inv = pl.reciprocal(dist + 1e-4, approx=True)
        spatial_parts.append(jnp.concatenate(
            [lx, ly, lz, dist, lx * inv, ly * inv, lz * inv], axis=-1))

    parts = pair_parts + node_parts + spatial_parts
    if out_pad:
        parts.append(jnp.zeros((TQ, out_pad), jnp.float32))
    # single lane-dense (multiple-of-128 wide) unmasked store of the whole output slab
    o_ref[0] = jnp.concatenate(parts, axis=-1)


def _pick_q_tile(L):
    # NOTE(v7x): with 2 TensorCores, ensure B * (L // TQ) >= 4 for megacore sharding;
    # the small candidates below keep nq >= 3 for typical L.
    for cand in (256, 128, 64, 32, 16, 8):
        if L % cand == 0:
            return cand
    return L


def ga_attention(qc, kcT, v, vp, z, wzb, mask, R9, t):
    B, L, _ = qc.shape
    Dz = z.shape[-1]
    H, Cv, Pv = NUM_HEADS, V_DIM, N_VPOINTS
    WPAD = qc.shape[-1] // H
    out_w = H * (Dz + Cv + 7 * Pv)                       # 208
    out_w_pad = ((out_w + 127) // 128) * 128             # 256 -> fully unmasked vst
    TQ = _pick_q_tile(L)
    nq = L // TQ

    mrow = mask.reshape(B, L, 1).astype(jnp.float32)
    mcol = mask.reshape(B, 1, L).astype(jnp.float32)

    kernel = functools.partial(
        _ga_attn_kernel, num_heads=H, v_dim=Cv, n_vp=Pv, pair_dim=Dz,
        w_pad=WPAD, out_pad=out_w_pad - out_w)

    # TODO(synk): at very large L the key/z j-axis should be streamed with an online
    # softmax (flash-style), z should be repacked lane-dense (Dz=16 pads lanes 8x),
    # and on v5e the z BlockSpec can use pipeline_mode=pl.Buffered(3).
    in_specs = [
        pl.BlockSpec((1, TQ, H * WPAD), lambda b, i: (b, i, 0)),
        pl.BlockSpec((1, H * WPAD, L), lambda b, i: (b, 0, 0)),
        pl.BlockSpec((1, L, H * Cv), lambda b, i: (b, 0, 0)),
        pl.BlockSpec((1, L, H * 3 * Pv), lambda b, i: (b, 0, 0)),
        pl.BlockSpec((1, TQ, L, Dz), lambda b, i: (b, i, 0, 0)),
        pl.BlockSpec((Dz, H), lambda b, i: (0, 0)),
        pl.BlockSpec((1, TQ, 1), lambda b, i: (b, i, 0)),
        pl.BlockSpec((1, 1, L), lambda b, i: (b, 0, 0)),
        pl.BlockSpec((1, TQ, 9), lambda b, i: (b, i, 0)),
        pl.BlockSpec((1, TQ, 3), lambda b, i: (b, i, 0)),
    ]
    return pl.pallas_call(
        kernel,
        grid=(B, nq),
        in_specs=in_specs,
        out_specs=pl.BlockSpec((1, TQ, out_w_pad), lambda b, i: (b, i, 0)),
        out_shape=jax.ShapeDtypeStruct((B, L, out_w_pad), jnp.float32),
        compiler_params=_mosaic(("parallel", "parallel")),
    )(qc, kcT, v, vp, z, wzb, mrow, mcol, R9, t)


# ============================ fused GA-block tail kernel ============================
# w_out linear + mask + residual + LN1 + 3-layer transition MLP + residual + LN2.

def _ga_tail_kernel(slab_ref, x_ref, mask_ref,
                    wo_ref, bo_ref, g1_ref, b1n_ref,
                    w1_ref, b1_ref, w2_ref, b2_ref, w3_ref, b3_ref,
                    g2_ref, b2n_ref, o_ref):
    def ln(h, g_ref, b_ref):
        mu = jnp.mean(h, axis=-1, keepdims=True)
        var = jnp.mean((h - mu) * (h - mu), axis=-1, keepdims=True)
        return (h - mu) * jax.lax.rsqrt(var + 1e-5) * g_ref[...] + b_ref[...]

    feat = jnp.dot(slab_ref[...], wo_ref[...],
                   preferred_element_type=jnp.float32) + bo_ref[...]
    feat = feat * mask_ref[...]
    xu = ln(x_ref[...] + feat, g1_ref, b1n_ref)
    h = jnp.maximum(jnp.dot(xu, w1_ref[...], preferred_element_type=jnp.float32) + b1_ref[...], 0.0)
    h = jnp.maximum(jnp.dot(h, w2_ref[...], preferred_element_type=jnp.float32) + b2_ref[...], 0.0)
    h = jnp.dot(h, w3_ref[...], preferred_element_type=jnp.float32) + b3_ref[...]
    o_ref[...] = ln(xu + h, g2_ref, b2n_ref)


def ga_tail(slab, x, mask, p):
    B, L, S = slab.shape
    D = x.shape[-1]
    rows = B * L
    tm = _row_tile(rows)
    weights = [p['w_out'], p['b_out'].reshape(1, D),
               p['ln1_g'].reshape(1, D), p['ln1_b'].reshape(1, D),
               p['w_t1'], p['b_t1'].reshape(1, D),
               p['w_t2'], p['b_t2'].reshape(1, D),
               p['w_t3'], p['b_t3'].reshape(1, D),
               p['ln2_g'].reshape(1, D), p['ln2_b'].reshape(1, D)]

    def row(width):
        return pl.BlockSpec((tm, width), lambda i: (i, 0))

    y = pl.pallas_call(
        _ga_tail_kernel,
        grid=(pl.cdiv(rows, tm),),
        in_specs=[row(S), row(D), row(1)]
                 + [pl.BlockSpec(w.shape, lambda i: (0, 0)) for w in weights],
        out_specs=row(D),
        out_shape=jax.ShapeDtypeStruct((rows, D), jnp.float32),
        compiler_params=_mosaic(("parallel",)),
    )(slab.reshape(rows, S), x.reshape(rows, D),
      mask.reshape(rows, 1).astype(jnp.float32), *weights)
    return y.reshape(B, L, D)


# ============================ JAX glue ============================

def construct_3d_basis(center, p1, p2):
    v1 = p1 - center
    e1 = v1 / (jnp.linalg.norm(v1, axis=-1, keepdims=True) + 1e-10)
    v2 = p2 - center
    u2 = v2 - jnp.sum(v2 * e1, axis=-1, keepdims=True) * e1
    e2 = u2 / (jnp.linalg.norm(u2, axis=-1, keepdims=True) + 1e-10)
    e3 = jnp.cross(e1, e2)
    return jnp.stack([e1, e2, e3], axis=-1)        # (B, L, 3, 3), columns e1,e2,e3


def single_encoder(p, aa, mask_residue):
    # TODO(synk): reference PerResidueEncoder's exact featurization (dihedrals, atoms)
    # is not in the provided snippet; implemented as aa-embedding + MLP + residue mask.
    x = jnp.take(p['emb_aa'], aa, axis=0)
    x = pallas_mlp3(x, p['w_s1'], p['b_s1'], p['w_s2'], p['b_s2'], p['w_s3'], p['b_s3'],
                    relus=(True, True, False))
    return x * mask_residue[..., None]


def pair_encoder(p, aa, res_nb, chain_nb, pos_atoms, mask_atoms):
    B, L = aa.shape
    A = pos_atoms.shape[2]
    mask_res = mask_atoms[:, :, 1]
    mask2d = (mask_res[:, :, None] * mask_res[:, None, :]).reshape(B, L, L, 1)

    aa_pair = aa[:, :, None] * MAX_AA + aa[:, None, :]
    base = jnp.take(p['emb_aapair'], aa_pair, axis=0)
    same_chain = (chain_nb[:, :, None] == chain_nb[:, None, :]).astype(jnp.float32)
    relpos = jnp.clip(res_nb[:, :, None] - res_nb[:, None, :], -MAX_RELPOS, MAX_RELPOS) + MAX_RELPOS
    base = base + jnp.take(p['emb_relpos'], relpos, axis=0) * same_chain[..., None]

    # softplus on the small (484, 16) table BEFORE the gather (saves B*L^2*16 EUP ops).
    c = jnp.take(jax.nn.softplus(p['emb_distcoef']), aa_pair, axis=0)

    # TODO(synk): fully fuse d2 / atom-mask construction from per-residue pos_atoms into
    # the pair kernel to remove these B*L^2*16 XLA intermediates entirely.
    diff = (pos_atoms[:, :, None, :, None, :] - pos_atoms[:, None, :, None, :, :]) / 10.0
    d2 = jnp.sum(diff * diff, axis=-1).reshape(B, L, L, A * A)
    m_ap = (mask_atoms[:, :, None, :, None] * mask_atoms[:, None, :, None, :]).reshape(B, L, L, A * A)

    # TODO(synk): pairwise dihedral features of the reference ResiduePairEncoder omitted
    # (its source is not in the snippet).
    return pallas_pair_mlp(d2, c, m_ap, base, mask2d, p)      # bf16 (B, L, L, PAIR_DIM)


def ga_block(p, R, t, x, z, mask):
    B, L, _ = x.shape
    H, C, Cv, P, Pv = NUM_HEADS, QK_DIM, V_DIM, N_QPOINTS, N_VPOINTS
    W = C + 3 * P + 2
    WPAD = ((W + 7) // 8) * 8

    # one fused (NODE_DIM x 240) projection instead of six narrow MXU calls
    w_all = jnp.concatenate([p['wq'], p['wk'], p['wv'], p['wqp'], p['wkp'], p['wvp']], axis=1)
    b_all = jnp.concatenate([p['bq'], p['bk'], p['bv'], p['bqp'], p['bkp'], p['bvp']], axis=0)
    proj = linear(x, w_all, b_all)
    dq, dk, dv = H * C, H * C, H * Cv
    dqp, dkp, dvp = H * 3 * P, H * 3 * P, H * 3 * Pv
    off = np.cumsum([0, dq, dk, dv, dqp, dkp]).tolist()
    q = proj[..., off[0]:off[0] + dq]
    k = proj[..., off[1]:off[1] + dk]
    v = proj[..., off[2]:off[2] + dv]
    qp = proj[..., off[3]:off[3] + dqp].reshape(B, L, H, P, 3)
    kp = proj[..., off[4]:off[4] + dkp].reshape(B, L, H, P, 3)
    vp = proj[..., off[5]:off[5] + dvp].reshape(B, L, H, Pv, 3)

    def local_to_global(pt):
        return jnp.einsum('blij,blhpj->blhpi', R, pt) + t[:, :, None, None, :]

    def coord_major(pt):   # (B,L,H,Pp,3) -> (B,L,H,3*Pp), per head [x*Pp | y*Pp | z*Pp]
        n = pt.shape[3]
        return jnp.transpose(pt, (0, 1, 2, 4, 3)).reshape(B, L, H, 3 * n)

    qp_gh = coord_major(local_to_global(qp))        # (B, L, H, 3P)
    kp_gh = coord_major(local_to_global(kp))
    vp_g = coord_major(local_to_global(vp)).reshape(B, L, H * 3 * Pv)

    # spatial_coef is a deterministic numpy parameter -> folded to static per-head coeffs.
    # TODO(synk): this freezes a nominally learnable parameter (inference-only fold).
    gamma = np.log1p(np.exp(p['spatial_coef']))
    gcoef = -gamma * math.sqrt(2.0 / (9.0 * P)) / 2.0
    g = jnp.asarray((gcoef / math.sqrt(3.0)).reshape(1, 1, H, 1), jnp.float32)
    s_node = 1.0 / math.sqrt(C) / math.sqrt(3.0)

    # Precomputed combined operands for the in-kernel logits matmul:
    #   qcomb = [q*s_node | qp*(-2g) | qn*g | g]   kcomb = [k | kp | 1 | kn]
    # (norm terms ride along via the extra columns; g folded entirely on the q side).
    qh = q.reshape(B, L, H, C)
    kh = k.reshape(B, L, H, C)
    qn = jnp.sum(qp_gh * qp_gh, axis=-1, keepdims=True)
    kn = jnp.sum(kp_gh * kp_gh, axis=-1, keepdims=True)
    ones = jnp.ones_like(qn)
    q_cols = [qh * s_node, qp_gh * (-2.0) * g, qn * g, g * ones]
    k_cols = [kh, kp_gh, ones, kn]
    if WPAD > W:
        zpad = jnp.zeros((B, L, H, WPAD - W), jnp.float32)
        q_cols.append(zpad)
        k_cols.append(zpad)
    qc = jnp.concatenate(q_cols, axis=-1).reshape(B, L, H * WPAD).astype(jnp.bfloat16)
    kcT = jnp.transpose(jnp.concatenate(k_cols, axis=-1).reshape(B, L, H * WPAD),
                        (0, 2, 1)).astype(jnp.bfloat16)       # (B, H*WPAD, L)

    R9 = R.reshape(B, L, 9)
    # NOTE: the pair->logit bias bzb is constant over j and cancels in softmax; this
    # invariant holds only because logits are never emitted from the kernel.
    wzb_s = (p['wzb'] / math.sqrt(3.0)).astype(jnp.bfloat16)  # 1/sqrt(3) folded in

    slab = ga_attention(qc, kcT, v.astype(jnp.bfloat16), vp_g.astype(jnp.bfloat16),
                        z, wzb_s, mask, R9, t)

    # NOTE: the 256-wide slab orders features as [pair2node | node | per-head pts,dist,dir
    # | zero pad]; equivalent to the reference concat order up to a fixed permutation of
    # w_out's rows (weights are randomly initialized in this script).
    return ga_tail(slab, x, mask, p)


def ga_encoder(block_params, pos_atoms, res_feat, pair_feat, mask):
    # frames from the (up to 4) residue atoms; center = atom index 1 (CA-like)
    center = pos_atoms[:, :, 1]
    R = construct_3d_basis(center, pos_atoms[:, :, 2], pos_atoms[:, :, 0])
    t = center
    x = res_feat
    for p in block_params:
        x = ga_block(p, R, t, x, pair_feat, mask)
    return x


def ipa_forward(params, inputs):
    mask_residue = inputs['mask_atoms'][:, :, 1]
    x = single_encoder(params['single'], inputs['restype'], mask_residue)
    z = pair_encoder(params['pair'], inputs['restype'], inputs['res_nb'],
                     inputs['chain_nb'], inputs['pos_atoms'], inputs['mask_atoms'])
    x = ga_encoder(params['ga_blocks'], inputs['pos_atoms'], x, z, mask_residue)

    # pooling == 'mean'
    seq_mask = inputs['seq_mask']
    emb = jnp.sum(x * seq_mask[..., None], axis=1)
    emb = emb / (jnp.sum(seq_mask, axis=1, keepdims=True) + 1e-10)

    # tiny pooled prediction head stays in plain XLA (launch overhead > compute)
    hp = params['head']
    h = jax.nn.relu(emb @ hp['w1'] + hp['b1'])
    h = jax.nn.relu(h @ hp['w2'] + hp['b2'])
    out = h @ hp['w3'] + hp['b3']
    return jnp.squeeze(out, axis=1)


# ============================ parameter init ============================

def init_params(key):
    keys = iter(jax.random.split(key, 48))

    def w(shape, scale=0.05):
        return jax.random.normal(next(keys), shape, jnp.float32) * scale

    def b(n):
        return jnp.zeros((n,), jnp.float32)

    single = dict(
        emb_aa=w((MAX_AA, NODE_DIM)),
        w_s1=w((NODE_DIM, NODE_DIM)), b_s1=b(NODE_DIM),
        w_s2=w((NODE_DIM, NODE_DIM)), b_s2=b(NODE_DIM),
        w_s3=w((NODE_DIM, NODE_DIM)), b_s3=b(NODE_DIM),
    )
    AA2 = MAX_AA * MAX_AA
    pair = dict(
        emb_aapair=w((AA2, PAIR_DIM)),
        emb_relpos=w((2 * MAX_RELPOS + 1, PAIR_DIM)),
        emb_distcoef=jnp.zeros((AA2, NUM_ATOMS * NUM_ATOMS), jnp.float32),
        w_d1=w((NUM_ATOMS * NUM_ATOMS, PAIR_DIM)), b_d1=b(PAIR_DIM),
        w_d2=w((PAIR_DIM, PAIR_DIM)), b_d2=b(PAIR_DIM),
        w_p1=w((PAIR_DIM, PAIR_DIM)), b_p1=b(PAIR_DIM),
        w_p2=w((PAIR_DIM, PAIR_DIM)), b_p2=b(PAIR_DIM),
        w_p3=w((PAIR_DIM, PAIR_DIM)), b_p3=b(PAIR_DIM),
    )
    blocks = []
    out_in = NUM_HEADS * (PAIR_DIM + V_DIM + N_VPOINTS * 7)       # 208
    out_in_pad = ((out_in + 127) // 128) * 128                    # 256 (zero slab columns)
    for _ in range(NUM_LAYERS):
        blocks.append(dict(
            wq=w((NODE_DIM, NUM_HEADS * QK_DIM)), bq=b(NUM_HEADS * QK_DIM),
            wk=w((NODE_DIM, NUM_HEADS * QK_DIM)), bk=b(NUM_HEADS * QK_DIM),
            wv=w((NODE_DIM, NUM_HEADS * V_DIM)), bv=b(NUM_HEADS * V_DIM),
            wqp=w((NODE_DIM, NUM_HEADS * N_QPOINTS * 3)), bqp=b(NUM_HEADS * N_QPOINTS * 3),
            wkp=w((NODE_DIM, NUM_HEADS * N_QPOINTS * 3)), bkp=b(NUM_HEADS * N_QPOINTS * 3),
            wvp=w((NODE_DIM, NUM_HEADS * N_VPOINTS * 3)), bvp=b(NUM_HEADS * N_VPOINTS * 3),
            wzb=w((PAIR_DIM, NUM_HEADS)), bzb=b(NUM_HEADS),   # bzb cancels in softmax
            spatial_coef=np.full((NUM_HEADS,), np.log(np.e - 1.0), dtype=np.float32),
            # rows [out_in:out_in_pad] multiply zero slab columns (lane-padding only)
            w_out=w((out_in_pad, NODE_DIM)), b_out=b(NODE_DIM),
            ln1_g=jnp.ones((NODE_DIM,), jnp.float32), ln1_b=b(NODE_DIM),
            w_t1=w((NODE_DIM, NODE_DIM)), b_t1=b(NODE_DIM),
            w_t2=w((NODE_DIM, NODE_DIM)), b_t2=b(NODE_DIM),
            w_t3=w((NODE_DIM, NODE_DIM)), b_t3=b(NODE_DIM),
            ln2_g=jnp.ones((NODE_DIM,), jnp.float32), ln2_b=b(NODE_DIM),
        ))
    head = dict(
        w1=w((NODE_DIM, NODE_DIM)), b1=b(NODE_DIM),
        w2=w((NODE_DIM, NODE_DIM)), b2=b(NODE_DIM),
        w3=w((NODE_DIM, OUTPUT_DIM)), b3=b(OUTPUT_DIM),
    )
    return dict(single=single, pair=pair, ga_blocks=blocks, head=head)


# ============================ main ============================

if __name__ == "__main__":
    key = jax.random.PRNGKey(0)
    pkey, dkey = jax.random.split(key)
    params = init_params(pkey)

    # L=24 exercises the query-block tiling (TQ=8 -> 3 q-tiles) and the row-tiled
    # pair kernel (B*L*L = 1152 rows in a single 4096-row tile).
    B, L = 2, 24
    k1, k2 = jax.random.split(dkey)
    restype = jax.random.randint(k1, (B, L), 0, MAX_AA, dtype=jnp.int32)
    res_nb = jnp.tile(jnp.arange(L, dtype=jnp.int32)[None, :], (B, 1))
    chain_nb = jnp.concatenate(
        [jnp.zeros((B, L // 2), jnp.int32), jnp.ones((B, L - L // 2), jnp.int32)], axis=1)
    pos_atoms = jax.random.normal(k2, (B, L, NUM_ATOMS, 3), jnp.float32) * 3.0
    mask_atoms = jnp.ones((B, L, NUM_ATOMS), jnp.float32)
    mask_atoms = mask_atoms.at[1, L - 1].set(0.0)          # one padded residue
    seq_mask = mask_atoms[:, :, 1]

    inputs = dict(restype=restype, res_nb=res_nb, chain_nb=chain_nb,
                  pos_atoms=pos_atoms, mask_atoms=mask_atoms,
                  seq_mask=seq_mask, size=B)

    out = ipa_forward(params, inputs)
    out = jax.block_until_ready(out)
    assert out.shape == (B,) and bool(jnp.all(jnp.isfinite(out)))
    print("KERNEL_OK")
</pallas_src>

<mosaic_0001>
module attributes {stable_mosaic.version = 11 : i64} {
  func.func @_mlp3_kernel(%arg0: i32, %arg1: memref<48x64xf32, #tpu.memory_space<vmem>>, %arg2: memref<64x64xf32, #tpu.memory_space<vmem>>, %arg3: memref<1x64xf32, #tpu.memory_space<vmem>>, %arg4: memref<64x64xf32, #tpu.memory_space<vmem>>, %arg5: memref<1x64xf32, #tpu.memory_space<vmem>>, %arg6: memref<64x64xf32, #tpu.memory_space<vmem>>, %arg7: memref<1x64xf32, #tpu.memory_space<vmem>>, %arg8: memref<48x64xf32, #tpu.memory_space<vmem>>) attributes {dimension_semantics = [#tpu.dimension_semantics<parallel>], iteration_bounds = array<i64: 1>, scalar_prefetch = 0 : i64, scratch_operands = 0 : i64, tpu.core_type = #tpu.core_type<tc>, window_params = [{transform_indices = @transform_0, window_bounds = array<i64: 48, 64>}, {pipeline_mode = #tpu.pipeline_mode<synchronous>, transform_indices = @transform_1, window_bounds = array<i64: 64, 64>}, {pipeline_mode = #tpu.pipeline_mode<synchronous>, transform_indices = @transform_2, window_bounds = array<i64: 1, 64>}, {pipeline_mode = #tpu.pipeline_mode<synchronous>, transform_indices = @transform_3, window_bounds = array<i64: 64, 64>}, {pipeline_mode = #tpu.pipeline_mode<synchronous>, transform_indices = @transform_4, window_bounds = array<i64: 1, 64>}, {pipeline_mode = #tpu.pipeline_mode<synchronous>, transform_indices = @transform_5, window_bounds = array<i64: 64, 64>}, {pipeline_mode = #tpu.pipeline_mode<synchronous>, transform_indices = @transform_6, window_bounds = array<i64: 1, 64>}, {transform_indices = @transform_7, window_bounds = array<i64: 48, 64>}]} {
    %c0 = arith.constant 0 : index
    %c0_0 = arith.constant 0 : index
    %0 = vector.load %arg1[%c0, %c0_0] : memref<48x64xf32, #tpu.memory_space<vmem>>, vector<48x64xf32>
    %c0_1 = arith.constant 0 : index
    %c0_2 = arith.constant 0 : index
    %1 = vector.load %arg2[%c0_1, %c0_2] : memref<64x64xf32, #tpu.memory_space<vmem>>, vector<64x64xf32>
    %cst = arith.constant dense<0.000000e+00> : vector<48x64xf32>
    %2 = tpu.matmul %0, %1, %cst {dimension_numbers = #tpu.dot_dimension_numbers<[1], [0], [0], [1], [0, 0, 1, 1], [], []>} : vector<48x64xf32>, vector<64x64xf32>, vector<48x64xf32> -> vector<48x64xf32>
    %c0_3 = arith.constant 0 : index
    %c0_4 = arith.constant 0 : index
    %3 = vector.load %arg3[%c0_3, %c0_4] : memref<1x64xf32, #tpu.memory_space<vmem>>, vector<1x64xf32>
    %4 = vector.broadcast %3 : vector<1x64xf32> to vector<48x64xf32>
    %5 = arith.addf %2, %4 : vector<48x64xf32>
    %cst_5 = arith.constant 0.000000e+00 : f32
    %6 = vector.broadcast %cst_5 : f32 to vector<48x64xf32>
    %7 = arith.maximumf %5, %6 : vector<48x64xf32>
    %c0_6 = arith.constant 0 : index
    %c0_7 = arith.constant 0 : index
    %8 = vector.load %arg4[%c0_6, %c0_7] : memref<64x64xf32, #tpu.memory_space<vmem>>, vector<64x64xf32>
    %cst_8 = arith.constant dense<0.000000e+00> : vector<48x64xf32>
    %9 = tpu.matmul %7, %8, %cst_8 {dimension_numbers = #tpu.dot_dimension_numbers<[1], [0], [0], [1], [0, 0, 1, 1], [], []>} : vector<48x64xf32>, vector<64x64xf32>, vector<48x64xf32> -> vector<48x64xf32>
    %c0_9 = arith.constant 0 : index
    %c0_10 = arith.constant 0 : index
    %10 = vector.load %arg5[%c0_9, %c0_10] : memref<1x64xf32, #tpu.memory_space<vmem>>, vector<1x64xf32>
    %11 = vector.broadcast %10 : vector<1x64xf32> to vector<48x64xf32>
    %12 = arith.addf %9, %11 : vector<48x64xf32>
    %cst_11 = arith.constant 0.000000e+00 : f32
    %13 = vector.broadcast %cst_11 : f32 to vector<48x64xf32>
    %14 = arith.maximumf %12, %13 : vector<48x64xf32>
    %c0_12 = arith.constant 0 : index
    %c0_13 = arith.constant 0 : index
    %15 = vector.load %arg6[%c0_12, %c0_13] : memref<64x64xf32, #tpu.memory_space<vmem>>, vector<64x64xf32>
    %cst_14 = arith.constant dense<0.000000e+00> : vector<48x64xf32>
    %16 = tpu.matmul %14, %15, %cst_14 {dimension_numbers = #tpu.dot_dimension_numbers<[1], [0], [0], [1], [0, 0, 1, 1], [], []>} : vector<48x64xf32>, vector<64x64xf32>, vector<48x64xf32> -> vector<48x64xf32>
    %c0_15 = arith.constant 0 : index
    %c0_16 = arith.constant 0 : index
    %17 = vector.load %arg7[%c0_15, %c0_16] : memref<1x64xf32, #tpu.memory_space<vmem>>, vector<1x64xf32>
    %18 = vector.broadcast %17 : vector<1x64xf32> to vector<48x64xf32>
    %19 = arith.addf %16, %18 : vector<48x64xf32>
    %c0_17 = arith.constant 0 : index
    %c0_18 = arith.constant 0 : index
    %20 = vector.load %arg8[%c0_17, %c0_18] : memref<48x64xf32, #tpu.memory_space<vmem>>, vector<48x64xf32>
    tpu.vector_store %arg8[%c0_17, %c0_18], %19 {strides = array<i32>} : memref<48x64xf32, #tpu.memory_space<vmem>>, vector<48x64xf32>,
    return
  }
  func.func @transform_0(%arg0: i32) -> (i32, i32) {
    %c0_i32 = arith.constant 0 : i32
    %c0_i32_0 = arith.constant 0 : i32
    return %arg0, %c0_i32 : i32, i32
  }
  func.func @transform_1(%arg0: i32) -> (i32, i32) {
    %c0_i32 = arith.constant 0 : i32
    %c0_i32_0 = arith.constant 0 : i32
    %c0_i32_1 = arith.constant 0 : i32
    return %c0_i32, %c0_i32_0 : i32, i32
  }
  func.func @transform_2(%arg0: i32) -> (i32, i32) {
    %c0_i32 = arith.constant 0 : i32
    %c0_i32_0 = arith.constant 0 : i32
    %c0_i32_1 = arith.constant 0 : i32
    return %c0_i32, %c0_i32_0 : i32, i32
  }
  func.func @transform_3(%arg0: i32) -> (i32, i32) {
    %c0_i32 = arith.constant 0 : i32
    %c0_i32_0 = arith.constant 0 : i32
    %c0_i32_1 = arith.constant 0 : i32
    return %c0_i32, %c0_i32_0 : i32, i32
  }
  func.func @transform_4(%arg0: i32) -> (i32, i32) {
    %c0_i32 = arith.constant 0 : i32
    %c0_i32_0 = arith.constant 0 : i32
    %c0_i32_1 = arith.constant 0 : i32
    return %c0_i32, %c0_i32_0 : i32, i32
  }
  func.func @transform_5(%arg0: i32) -> (i32, i32) {
    %c0_i32 = arith.constant 0 : i32
    %c0_i32_0 = arith.constant 0 : i32
    %c0_i32_1 = arith.constant 0 : i32
    return %c0_i32, %c0_i32_0 : i32, i32
  }
  func.func @transform_6(%arg0: i32) -> (i32, i32) {
    %c0_i32 = arith.constant 0 : i32
    %c0_i32_0 = arith.constant 0 : i32
    %c0_i32_1 = arith.constant 0 : i32
    return %c0_i32, %c0_i32_0 : i32, i32
  }
  func.func @transform_7(%arg0: i32) -> (i32, i32) {
    %c0_i32 = arith.constant 0 : i32
    %c0_i32_0 = arith.constant 0 : i32
    return %arg0, %c0_i32 : i32, i32
  }
}

</mosaic_0001>

<llo_original>
// kernel: tpu_custom_call.1
$region0: #{tpu_custom_call.1}
  #allocation0 [shape = 'u32[]', space=smem, size = 0x4, offset = 0x4, fixed_abs, tag = 'smem constant byte address 0x4 - core index']
  #allocation1 [shape = 'u32[144,128]{1,0:T(1,128)}', space=vmem, size = 0x12000, scoped, tag = 'internal scratch']
  %s0 = inlined_call_operand.hbm [shape: f32[48,64], index: 0, kind: input, shape index: {}]
  %s1 = inlined_call_operand.hbm [shape: f32[64,64], index: 1, kind: input, shape index: {}]
  %s2 = inlined_call_operand.vmem [shape: f32[1,64], index: 2, kind: input, shape index: {}]
  %s3 = inlined_call_operand.hbm [shape: f32[64,64], index: 3, kind: input, shape index: {}]
  %s4 = inlined_call_operand.vmem [shape: f32[1,64], index: 4, kind: input, shape index: {}]
  %s5 = inlined_call_operand.hbm [shape: f32[64,64], index: 5, kind: input, shape index: {}]
  %s6 = inlined_call_operand.vmem [shape: f32[1,64], index: 6, kind: input, shape index: {}]
  %s7 = inlined_call_operand.hbm [shape: f32[48,64], index: 7, kind: output, shape index: {}]
  %s8 = sld [smem:[#allocation0]]
  $region54: #{tpu_custom_call.1} parent=0
    _
  %s10 = ssub.s32 1, %s8
  %s11 = scalar_select 0, %s10, %s8
  $region1: #{tpu_custom_call.1} parent=0
    #allocation2 [shape = 'u8[24576]{0}', space=vmem, size = 0x6000, scoped, tag = 'input window, operand 0, single buffered']
    #allocation3 [shape = 's32[1]{0}', space=sflag, size = 0x4, scoped, tag = 'scoped memory for tpu_custom_call.1']
    #allocation4 [shape = 's32[1]{0}', space=sflag, size = 0x4, scoped, tag = 'scoped memory for tpu_custom_call.1']
    #allocation5 [shape = 'u8[32768]{0}', space=vmem, size = 0x8000, scoped, tag = 'input window, operand 1, single buffered']
    #allocation6 [shape = 's32[1]{0}', space=sflag, size = 0x4, scoped, tag = 'scoped memory for tpu_custom_call.1']
    #allocation7 [shape = 'u8[32768]{0}', space=vmem, size = 0x8000, scoped, tag = 'input window, operand 3, single buffered']
    #allocation8 [shape = 'u8[32768]{0}', space=vmem, size = 0x8000, scoped, tag = 'input window, operand 5, single buffered']
    #allocation9 [shape = 's32[1]{0}', space=sflag, size = 0x4, scoped, tag = 'scoped memory for tpu_custom_call.1']
    #allocation10 [shape = 'u8[24576]{0}', space=vmem, size = 0x6000, scoped, tag = 'output window, operand 0, single buffered']
    %12 = vsyncpa [#allocation3], 0
    %13 = vsyncpa [#allocation6], 0
    %14 = vsyncpa [#allocation9], 0
    %15 = vsyncpa [#allocation4], 0
    // Predicated region
    $region2: #{tpu_custom_call.1} parent=1 // pred_check
      _
    $region3: #{tpu_custom_call.1} parent=1 // pred_check_branch
      %17 = sbr.rel (0) target = $region5
    $region4: #{tpu_custom_call.1} parent=1 // pred_region
      %s19 = ssub.s32 768, 768
      %20 = vsyncadd [#allocation3], %s19
      %s21 = sshll.u32 [#allocation2], 4
      %s22 = int_to_ptr.vmem [resolvable:$true] %s21
      %27 = dma.hbm_to_vmem [thread:$0]  %s0, 768, %s22, [#allocation3], 128, 128, 8
    $region5: #{tpu_custom_call.1} parent=1 // pred_fallthru
      _
    // Predicated region
    $region6: #{tpu_custom_call.1} parent=1 // pred_check
      _
    $region7: #{tpu_custom_call.1} parent=1 // pred_check_branch
      %29 = sbr.rel (0) target = $region9
    $region8: #{tpu_custom_call.1} parent=1 // pred_region
      %s31 = ssub.s32 1024, 1024
      %32 = vsyncadd [#allocation6], %s31
      %s33 = sshll.u32 [#allocation5], 4
      %s34 = int_to_ptr.vmem [resolvable:$true] %s33
      %39 = dma.hbm_to_vmem [thread:$0]  %s1, 1024, %s34, [#allocation6], 128, 128, 8
    $region9: #{tpu_custom_call.1} parent=1 // pred_fallthru
      _
    // Predicated region
    $region10: #{tpu_custom_call.1} parent=1 // pred_check
      _
    $region11: #{tpu_custom_call.1} parent=1 // pred_check_branch
      %41 = sbr.rel (0) target = $region13
    $region12: #{tpu_custom_call.1} parent=1 // pred_region
      _
    $region13: #{tpu_custom_call.1} parent=1 // pred_fallthru
      _
    // Predicated region
    $region14: #{tpu_custom_call.1} parent=1 // pred_check
      _
    $region15: #{tpu_custom_call.1} parent=1 // pred_check_branch
      %43 = sbr.rel (0) target = $region17
    $region16: #{tpu_custom_call.1} parent=1 // pred_region
      %s45 = ssub.s32 1024, 1024
      %46 = vsyncadd [#allocation6], %s45
      %s47 = sshll.u32 [#allocation7], 4
      %s48 = int_to_ptr.vmem [resolvable:$true] %s47
      %53 = dma.hbm_to_vmem [thread:$0]  %s3, 1024, %s48, [#allocation6], 128, 128, 8
    $region17: #{tpu_custom_call.1} parent=1 // pred_fallthru
      _
    // Predicated region
    $region18: #{tpu_custom_call.1} parent=1 // pred_check
      _
    $region19: #{tpu_custom_call.1} parent=1 // pred_check_branch
      %55 = sbr.rel (0) target = $region21
    $region20: #{tpu_custom_call.1} parent=1 // pred_region
      _
    $region21: #{tpu_custom_call.1} parent=1 // pred_fallthru
      _
    // Predicated region
    $region22: #{tpu_custom_call.1} parent=1 // pred_check
      _
    $region23: #{tpu_custom_call.1} parent=1 // pred_check_branch
      %57 = sbr.rel (0) target = $region25
    $region24: #{tpu_custom_call.1} parent=1 // pred_region
      %s59 = ssub.s32 1024, 1024
      %60 = vsyncadd [#allocation9], %s59
      %s61 = sshll.u32 [#allocation8], 4
      %s62 = int_to_ptr.vmem [resolvable:$true] %s61
      %67 = dma.hbm_to_vmem [thread:$0]  %s5, 1024, %s62, [#allocation9], 128, 128, 8
    $region25: #{tpu_custom_call.1} parent=1 // pred_fallthru
      _
    // Predicated region
    $region26: #{tpu_custom_call.1} parent=1 // pred_check
      _
    $region27: #{tpu_custom_call.1} parent=1 // pred_check_branch
      %69 = sbr.rel (0) target = $region29
    $region28: #{tpu_custom_call.1} parent=1 // pred_region
      _
    $region29: #{tpu_custom_call.1} parent=1 // pred_fallthru
      _
    // Predicated region
    $region30: #{tpu_custom_call.1} parent=1 // pred_check
      _
    $region31: #{tpu_custom_call.1} parent=1 // pred_check_branch
      %71 = sbr.rel (0) target = $region33
    $region32: #{tpu_custom_call.1} parent=1 // pred_region
      %72 = dma.done [#allocation3], 768
    $region33: #{tpu_custom_call.1} parent=1 // pred_fallthru
      _
    // Predicated region
    $region34: #{tpu_custom_call.1} parent=1 // pred_check
      _
    $region35: #{tpu_custom_call.1} parent=1 // pred_check_branch
      %74 = sbr.rel (0) target = $region37
    $region36: #{tpu_custom_call.1} parent=1 // pred_region
      %75 = dma.done [#allocation6], 1024
    $region37: #{tpu_custom_call.1} parent=1 // pred_fallthru
      _
    // Predicated region
    $region38: #{tpu_custom_call.1} parent=1 // pred_check
      _
    $region39: #{tpu_custom_call.1} parent=1 // pred_check_branch
      %77 = sbr.rel (0) target = $region41
    $region40: #{tpu_custom_call.1} parent=1 // pred_region
      %78 = dma.done [#allocation6], 1024
    $region41: #{tpu_custom_call.1} parent=1 // pred_fallthru
      _
    // Predicated region
    $region42: #{tpu_custom_call.1} parent=1 // pred_check
      _
    $region43: #{tpu_custom_call.1} parent=1 // pred_check_branch
      %80 = sbr.rel (0) target = $region45
    $region44: #{tpu_custom_call.1} parent=1 // pred_region
      %81 = dma.done [#allocation9], 1024
    $region45: #{tpu_custom_call.1} parent=1 // pred_fallthru
      _
    %v82 = vld [vmem:[#allocation2] sm:$0xff]
    %v83 = vld [vmem:[#allocation2 + $0x8] sm:$0xff]
    %v84 = vld [vmem:[#allocation2 + $0x10] sm:$0xff]
    %v85 = vld [vmem:[#allocation2 + $0x18] sm:$0xff]
    %v86 = vld [vmem:[#allocation2 + $0x20] sm:$0xff]
    %v87 = vld [vmem:[#allocation2 + $0x28] sm:$0xff]
    %v88 = vld [vmem:[#allocation5] sm:$0xff]
    %v89 = vld [vmem:[#allocation5 + $0x8] sm:$0xff]
    %v90 = vld [vmem:[#allocation5 + $0x10] sm:$0xff]
    %v91 = vld [vmem:[#allocation5 + $0x18] sm:$0xff]
    %v92 = vld [vmem:[#allocation5 + $0x20] sm:$0xff]
    %v93 = vld [vmem:[#allocation5 + $0x28] sm:$0xff]
    %v94 = vld [vmem:[#allocation5 + $0x30] sm:$0xff]
    %v95 = vld [vmem:[#allocation5 + $0x38] sm:$0xff]
    %v96 = vld [vmem:[%s2] sm:$0x1]
    %v98 = vlaneseq
    %v99 = vshrl.u32 %v98, 7
    %v100 = vsub.s32 0, %v99
    %v101 = vrot.slane %v96, %v100
    %vm103 = vcmask 523264
    %v105 = vsel %vm103, %v82, 0
    %v108 = vsel %vm103, %v83, 0
    %v111 = vsel %vm103, %v84, 0
    %v114 = vsel %vm103, %v85, 0
    %v117 = vsel %vm103, %v86, 0
    %v120 = vsel %vm103, %v87, 0
    %122 = vmatprep.subr.mxu0 0.0
    %123 = vmatpush1.msra.mxu0 0.0
    %124 = vmatprep.subr.mxu0 0.0
    %125 = vmatpush1.msra.mxu0 0.0
    %126 = vmatprep.subr.mxu0 0.0
    %127 = vmatpush1.msra.mxu0 0.0
    %128 = vmatprep.subr.mxu0 0.0
    %129 = vmatpush1.msra.mxu0 0.0
    %130 = vmatprep.subr.mxu0 0.0
    %131 = vmatpush1.msra.mxu0 0.0
    %132 = vmatprep.subr.mxu0 0.0
    %133 = vmatpush1.msra.mxu0 0.0
    %134 = vmatprep.subr.mxu0 0.0
    %135 = vmatpush1.msra.mxu0 0.0
    %136 = vmatprep.subr.mxu0 0.0
    %137 = vmatpush1.msra.mxu0 0.0
    %138 = vmatprep.subr.mxu0 0.0
    %139 = vmatpush1.msra.mxu0 %v95
    %140 = vmatprep.subr.mxu0 0.0
    %141 = vmatpush1.msra.mxu0 %v94
    %142 = vmatprep.subr.mxu0 0.0
    %143 = vmatpush1.msra.mxu0 %v93
    %144 = vmatprep.subr.mxu0 0.0
    %145 = vmatpush1.msra.mxu0 %v92
    %146 = vmatprep.subr.mxu0 0.0
    %147 = vmatpush1.msra.mxu0 %v91
    %148 = vmatprep.subr.mxu0 0.0
    %149 = vmatpush1.msra.mxu0 %v90
    %150 = vmatprep.subr.mxu0 0.0
    %151 = vmatpush1.msra.mxu0 %v89
    %152 = vmatprep.subr.mxu0 0.0
    %153 = vmatpush1.msra.mxu0 %v88
    %154 = vmatprep.subr.mxu0 0.0
    %155 = vmatpush2.msra.mxu0 0.0
    %156 = vmatprep.subr.mxu0 0.0
    %157 = vmatpush2.msra.mxu0 0.0
    %158 = vmatprep.subr.mxu0 0.0
    %159 = vmatpush2.msra.mxu0 0.0
    %160 = vmatprep.subr.mxu0 0.0
    %161 = vmatpush2.msra.mxu0 0.0
    %162 = vmatprep.subr.mxu0 0.0
    %163 = vmatpush2.msra.mxu0 0.0
    %164 = vmatprep.subr.mxu0 0.0
    %165 = vmatpush2.msra.mxu0 0.0
    %166 = vmatprep.subr.mxu0 0.0
    %167 = vmatpush2.msra.mxu0 0.0
    %168 = vmatprep.subr.mxu0 0.0
    %169 = vmatpush2.msra.mxu0 0.0
    %170 = vmatprep.subr.mxu0 0.0
    %171 = vmatpush2.msra.mxu0 0.0
    %172 = vmatprep.subr.mxu0 0.0
    %173 = vmatpush2.msra.mxu0 0.0
    %174 = vmatprep.subr.mxu0 0.0
    %175 = vmatpush2.msra.mxu0 0.0
    %176 = vmatprep.subr.mxu0 0.0
    %177 = vmatpush2.msra.mxu0 0.0
    %178 = vmatprep.subr.mxu0 0.0
    %179 = vmatpush2.msra.mxu0 0.0
    %180 = vmatprep.subr.mxu0 0.0
    %181 = vmatpush2.msra.mxu0 0.0
    %182 = vmatprep.subr.mxu0 0.0
    %183 = vmatpush2.msra.mxu0 0.0
    %184 = vmatprep.subr.mxu0 0.0
    %185 = vmatpush2.msra.mxu0 0.0
    %186 = vmatprep.mubr.f32.mxu0 0.0
    %187 = vmatmul.mubr.f32.gmra.mxu0 %v105
    %v188 = vpop.f32.mrf.mxu0
    %v189 = vadd.f32 %v101, %v188
    %v190 = vpop.f32.mrf.mxu0
    %191 = vmatprep.mubr.f32.mxu0 0.0
    %192 = vmatmul.mubr.f32.gmra.mxu0 %v108
    %v193 = vpop.f32.mrf.mxu0
    %v194 = vadd.f32 %v101, %v193
    %v195 = vpop.f32.mrf.mxu0
    %196 = vmatprep.mubr.f32.mxu0 0.0
    %197 = vmatmul.mubr.f32.gmra.mxu0 %v111
    %v198 = vpop.f32.mrf.mxu0
    %v199 = vadd.f32 %v101, %v198
    %v200 = vpop.f32.mrf.mxu0
    %201 = vmatprep.mubr.f32.mxu0 0.0
    %202 = vmatmul.mubr.f32.gmra.mxu0 %v114
    %v203 = vpop.f32.mrf.mxu0
    %v204 = vadd.f32 %v101, %v203
    %v205 = vpop.f32.mrf.mxu0
    %206 = vmatprep.mubr.f32.mxu0 0.0
    %207 = vmatmul.mubr.f32.gmra.mxu0 %v117
    %v208 = vpop.f32.mrf.mxu0
    %v209 = vadd.f32 %v101, %v208
    %v210 = vpop.f32.mrf.mxu0
    %211 = vmatprep.mubr.f32.mxu0 0.0
    %212 = vmatmul.mubr.f32.gmra.mxu0 %v120
    %v213 = vpop.f32.mrf.mxu0
    %v214 = vadd.f32 %v101, %v213
    %v215 = vpop.f32.mrf.mxu0
    %216 = vdwg.mxu0
    %v217 = vmax.f32 %v189, 0.0
    %v218 = vmax.f32 %v194, 0.0
    %v219 = vmax.f32 %v199, 0.0
    %v220 = vmax.f32 %v204, 0.0
    %v221 = vmax.f32 %v209, 0.0
    %v222 = vmax.f32 %v214, 0.0
    %v223 = vld [vmem:[#allocation7] sm:$0xff]
    %v224 = vld [vmem:[#allocation7 + $0x8] sm:$0xff]
    %v225 = vld [vmem:[#allocation7 + $0x10] sm:$0xff]
    %v226 = vld [vmem:[#allocation7 + $0x18] sm:$0xff]
    %v227 = vld [vmem:[#allocation7 + $0x20] sm:$0xff]
    %v228 = vld [vmem:[#allocation7 + $0x28] sm:$0xff]
    %v229 = vld [vmem:[#allocation7 + $0x30] sm:$0xff]
    %v230 = vld [vmem:[#allocation7 + $0x38] sm:$0xff]
    %v231 = vld [vmem:[%s4] sm:$0x1]
    %v233 = vlaneseq
    %v234 = vshrl.u32 %v233, 7
    %v235 = vsub.s32 0, %v234
    %v236 = vrot.slane %v231, %v235
    %v239 = vsel %vm103, %v217, 0
    %v242 = vsel %vm103, %v218, 0
    %v245 = vsel %vm103, %v219, 0
    %v248 = vsel %vm103, %v220, 0
    %v251 = vsel %vm103, %v221, 0
    %v254 = vsel %vm103, %v222, 0
    %256 = vmatprep.subr.mxu0 0.0
    %257 = vmatpush1.msra.mxu0 0.0
    %258 = vmatprep.subr.mxu0 0.0
    %259 = vmatpush1.msra.mxu0 0.0
    %260 = vmatprep.subr.mxu0 0.0
    %261 = vmatpush1.msra.mxu0 0.0
    %262 = vmatprep.subr.mxu0 0.0
    %263 = vmatpush1.msra.mxu0 0.0
    %264 = vmatprep.subr.mxu0 0.0
    %265 = vmatpush1.msra.mxu0 0.0
    %266 = vmatprep.subr.mxu0 0.0
    %267 = vmatpush1.msra.mxu0 0.0
    %268 = vmatprep.subr.mxu0 0.0
    %269 = vmatpush1.msra.mxu0 0.0
    %270 = vmatprep.subr.mxu0 0.0
    %271 = vmatpush1.msra.mxu0 0.0
    %272 = vmatprep.subr.mxu0 0.0
    %273 = vmatpush1.msra.mxu0 %v230
    %274 = vmatprep.subr.mxu0 0.0
    %275 = vmatpush1.msra.mxu0 %v229
    %276 = vmatprep.subr.mxu0 0.0
    %277 = vmatpush1.msra.mxu0 %v228
    %278 = vmatprep.subr.mxu0 0.0
    %279 = vmatpush1.msra.mxu0 %v227
    %280 = vmatprep.subr.mxu0 0.0
    %281 = vmatpush1.msra.mxu0 %v226
    %282 = vmatprep.subr.mxu0 0.0
    %283 = vmatpush1.msra.mxu0 %v225
    %284 = vmatprep.subr.mxu0 0.0
    %285 = vmatpush1.msra.mxu0 %v224
    %286 = vmatprep.subr.mxu0 0.0
    %287 = vmatpush1.msra.mxu0 %v223
    %288 = vmatprep.subr.mxu0 0.0
    %289 = vmatpush2.msra.mxu0 0.0
    %290 = vmatprep.subr.mxu0 0.0
    %291 = vmatpush2.msra.mxu0 0.0
    %292 = vmatprep.subr.mxu0 0.0
    %293 = vmatpush2.msra.mxu0 0.0
    %294 = vmatprep.subr.mxu0 0.0
    %295 = vmatpush2.msra.mxu0 0.0
    %296 = vmatprep.subr.mxu0 0.0
    %297 = vmatpush2.msra.mxu0 0.0
    %298 = vmatprep.subr.mxu0 0.0
    %299 = vmatpush2.msra.mxu0 0.0
    %300 = vmatprep.subr.mxu0 0.0
    %301 = vmatpush2.msra.mxu0 0.0
    %302 = vmatprep.subr.mxu0 0.0
    %303 = vmatpush2.msra.mxu0 0.0
    %304 = vmatprep.subr.mxu0 0.0
    %305 = vmatpush2.msra.mxu0 0.0
    %306 = vmatprep.subr.mxu0 0.0
    %307 = vmatpush2.msra.mxu0 0.0
    %308 = vmatprep.subr.mxu0 0.0
    %309 = vmatpush2.msra.mxu0 0.0
    %310 = vmatprep.subr.mxu0 0.0
    %311 = vmatpush2.msra.mxu0 0.0
    %312 = vmatprep.subr.mxu0 0.0
    %313 = vmatpush2.msra.mxu0 0.0
    %314 = vmatprep.subr.mxu0 0.0
    %315 = vmatpush2.msra.mxu0 0.0
    %316 = vmatprep.subr.mxu0 0.0
    %317 = vmatpush2.msra.mxu0 0.0
    %318 = vmatprep.subr.mxu0 0.0
    %319 = vmatpush2.msra.mxu0 0.0
    %320 = vmatprep.mubr.f32.mxu0 0.0
    %321 = vmatmul.mubr.f32.gmra.mxu0 %v239
    %v322 = vpop.f32.mrf.mxu0
    %v323 = vadd.f32 %v236, %v322
    %v324 = vpop.f32.mrf.mxu0
    %325 = vmatprep.mubr.f32.mxu0 0.0
    %326 = vmatmul.mubr.f32.gmra.mxu0 %v242
    %v327 = vpop.f32.mrf.mxu0
    %v328 = vadd.f32 %v236, %v327
    %v329 = vpop.f32.mrf.mxu0
    %330 = vmatprep.mubr.f32.mxu0 0.0
    %331 = vmatmul.mubr.f32.gmra.mxu0 %v245
    %v332 = vpop.f32.mrf.mxu0
    %v333 = vadd.f32 %v236, %v332
    %v334 = vpop.f32.mrf.mxu0
    %335 = vmatprep.mubr.f32.mxu0 0.0
    %336 = vmatmul.mubr.f32.gmra.mxu0 %v248
    %v337 = vpop.f32.mrf.mxu0
    %v338 = vadd.f32 %v236, %v337
    %v339 = vpop.f32.mrf.mxu0
    %340 = vmatprep.mubr.f32.mxu0 0.0
    %341 = vmatmul.mubr.f32.gmra.mxu0 %v251
    %v342 = vpop.f32.mrf.mxu0
    %v343 = vadd.f32 %v236, %v342
    %v344 = vpop.f32.mrf.mxu0
    %345 = vmatprep.mubr.f32.mxu0 0.0
    %346 = vmatmul.mubr.f32.gmra.mxu0 %v254
    %v347 = vpop.f32.mrf.mxu0
    %v348 = vadd.f32 %v236, %v347
    %v349 = vpop.f32.mrf.mxu0
    %350 = vdwg.mxu0
    %v351 = vmax.f32 %v323, 0.0
    %v352 = vmax.f32 %v328, 0.0
    %v353 = vmax.f32 %v333, 0.0
    %v354 = vmax.f32 %v338, 0.0
    %v355 = vmax.f32 %v343, 0.0
    %v356 = vmax.f32 %v348, 0.0
    %v357 = vld [vmem:[#allocation8] sm:$0xff]
    %v358 = vld [vmem:[#allocation8 + $0x8] sm:$0xff]
    %v359 = vld [vmem:[#allocation8 + $0x10] sm:$0xff]
    %v360 = vld [vmem:[#allocation8 + $0x18] sm:$0xff]
    %v361 = vld [vmem:[#allocation8 + $0x20] sm:$0xff]
    %v362 = vld [vmem:[#allocation8 + $0x28] sm:$0xff]
    %v363 = vld [vmem:[#allocation8 + $0x30] sm:$0xff]
    %v364 = vld [vmem:[#allocation8 + $0x38] sm:$0xff]
    %v365 = vld [vmem:[%s6] sm:$0x1]
    %v367 = vlaneseq
    %v368 = vshrl.u32 %v367, 7
    %v369 = vsub.s32 0, %v368
    %v370 = vrot.slane %v365, %v369
    %v373 = vsel %vm103, %v351, 0
    %v376 = vsel %vm103, %v352, 0
    %v379 = vsel %vm103, %v353, 0
    %v382 = vsel %vm103, %v354, 0
    %v385 = vsel %vm103, %v355, 0
    %v388 = vsel %vm103, %v356, 0
    %390 = vmatprep.subr.mxu0 0.0
    %391 = vmatpush1.msra.mxu0 0.0
    %392 = vmatprep.subr.mxu0 0.0
    %393 = vmatpush1.msra.mxu0 0.0
    %394 = vmatprep.subr.mxu0 0.0
    %395 = vmatpush1.msra.mxu0 0.0
    %396 = vmatprep.subr.mxu0 0.0
    %397 = vmatpush1.msra.mxu0 0.0
    %398 = vmatprep.subr.mxu0 0.0
    %399 = vmatpush1.msra.mxu0 0.0
    %400 = vmatprep.subr.mxu0 0.0
    %401 = vmatpush1.msra.mxu0 0.0
    %402 = vmatprep.subr.mxu0 0.0
    %403 = vmatpush1.msra.mxu0 0.0
    %404 = vmatprep.subr.mxu0 0.0
    %405 = vmatpush1.msra.mxu0 0.0
    %406 = vmatprep.subr.mxu0 0.0
    %407 = vmatpush1.msra.mxu0 %v364
    %408 = vmatprep.subr.mxu0 0.0
    %409 = vmatpush1.msra.mxu0 %v363
    %410 = vmatprep.subr.mxu0 0.0
    %411 = vmatpush1.msra.mxu0 %v362
    %412 = vmatprep.subr.mxu0 0.0
    %413 = vmatpush1.msra.mxu0 %v361
    %414 = vmatprep.subr.mxu0 0.0
    %415 = vmatpush1.msra.mxu0 %v360
    %416 = vmatprep.subr.mxu0 0.0
    %417 = vmatpush1.msra.mxu0 %v359
    %418 = vmatprep.subr.mxu0 0.0
    %419 = vmatpush1.msra.mxu0 %v358
    %420 = vmatprep.subr.mxu0 0.0
    %421 = vmatpush1.msra.mxu0 %v357
    %422 = vmatprep.subr.mxu0 0.0
    %423 = vmatpush2.msra.mxu0 0.0
    %424 = vmatprep.subr.mxu0 0.0
    %425 = vmatpush2.msra.mxu0 0.0
    %426 = vmatprep.subr.mxu0 0.0
    %427 = vmatpush2.msra.mxu0 0.0
    %428 = vmatprep.subr.mxu0 0.0
    %429 = vmatpush2.msra.mxu0 0.0
    %430 = vmatprep.subr.mxu0 0.0
    %431 = vmatpush2.msra.mxu0 0.0
    %432 = vmatprep.subr.mxu0 0.0
    %433 = vmatpush2.msra.mxu0 0.0
    %434 = vmatprep.subr.mxu0 0.0
    %435 = vmatpush2.msra.mxu0 0.0
    %436 = vmatprep.subr.mxu0 0.0
    %437 = vmatpush2.msra.mxu0 0.0
    %438 = vmatprep.subr.mxu0 0.0
    %439 = vmatpush2.msra.mxu0 0.0
    %440 = vmatprep.subr.mxu0 0.0
    %441 = vmatpush2.msra.mxu0 0.0
    %442 = vmatprep.subr.mxu0 0.0
    %443 = vmatpush2.msra.mxu0 0.0
    %444 = vmatprep.subr.mxu0 0.0
    %445 = vmatpush2.msra.mxu0 0.0
    %446 = vmatprep.subr.mxu0 0.0
    %447 = vmatpush2.msra.mxu0 0.0
    %448 = vmatprep.subr.mxu0 0.0
    %449 = vmatpush2.msra.mxu0 0.0
    %450 = vmatprep.subr.mxu0 0.0
    %451 = vmatpush2.msra.mxu0 0.0
    %452 = vmatprep.subr.mxu0 0.0
    %453 = vmatpush2.msra.mxu0 0.0
    %454 = vmatprep.mubr.f32.mxu0 0.0
    %455 = vmatmul.mubr.f32.gmra.mxu0 %v373
    %v456 = vpop.f32.mrf.mxu0
    %v457 = vadd.f32 %v370, %v456
    %v458 = vpop.f32.mrf.mxu0
    %459 = vmatprep.mubr.f32.mxu0 0.0
    %460 = vmatmul.mubr.f32.gmra.mxu0 %v376
    %v461 = vpop.f32.mrf.mxu0
    %v462 = vadd.f32 %v370, %v461
    %v463 = vpop.f32.mrf.mxu0
    %464 = vmatprep.mubr.f32.mxu0 0.0
    %465 = vmatmul.mubr.f32.gmra.mxu0 %v379
    %v466 = vpop.f32.mrf.mxu0
    %v467 = vadd.f32 %v370, %v466
    %v468 = vpop.f32.mrf.mxu0
    %469 = vmatprep.mubr.f32.mxu0 0.0
    %470 = vmatmul.mubr.f32.gmra.mxu0 %v382
    %v471 = vpop.f32.mrf.mxu0
    %v472 = vadd.f32 %v370, %v471
    %v473 = vpop.f32.mrf.mxu0
    %474 = vmatprep.mubr.f32.mxu0 0.0
    %475 = vmatmul.mubr.f32.gmra.mxu0 %v385
    %v476 = vpop.f32.mrf.mxu0
    %v477 = vadd.f32 %v370, %v476
    %v478 = vpop.f32.mrf.mxu0
    %479 = vmatprep.mubr.f32.mxu0 0.0
    %480 = vmatmul.mubr.f32.gmra.mxu0 %v388
    %v481 = vpop.f32.mrf.mxu0
    %v482 = vadd.f32 %v370, %v481
    %v483 = vpop.f32.mrf.mxu0
    %484 = vdwg.mxu0
    %485 = vst.msk [vmem:[#allocation10] sm:$0xff] %vm103, %v457
    %486 = vst.msk [vmem:[#allocation10 + $0x8] sm:$0xff] %vm103, %v462
    %487 = vst.msk [vmem:[#allocation10 + $0x10] sm:$0xff] %vm103, %v467
    %488 = vst.msk [vmem:[#allocation10 + $0x18] sm:$0xff] %vm103, %v472
    %489 = vst.msk [vmem:[#allocation10 + $0x20] sm:$0xff] %vm103, %v477
    %490 = vst.msk [vmem:[#allocation10 + $0x28] sm:$0xff] %vm103, %v482
    // Predicated region
    $region46: #{tpu_custom_call.1} parent=1 // pred_check
      _
    $region47: #{tpu_custom_call.1} parent=1 // pred_check_branch
      %492 = sbr.rel (0) target = $region49
    $region48: #{tpu_custom_call.1} parent=1 // pred_region
      %s494 = ssub.s32 768, 768
      %495 = vsyncadd [#allocation4], %s494
      %s496 = sshll.u32 [#allocation10], 4
      %s497 = int_to_ptr.vmem [resolvable:$true] %s496
      %502 = dma.vmem_to_hbm [thread:$0]  %s497, 768, %s7, [#allocation4], 128, 128, 8
    $region49: #{tpu_custom_call.1} parent=1 // pred_fallthru
      _
    // Predicated region
    $region50: #{tpu_custom_call.1} parent=1 // pred_check
      _
    $region51: #{tpu_custom_call.1} parent=1 // pred_check_branch
      %504 = sbr.rel (0) target = $region53
    $region52: #{tpu_custom_call.1} parent=1 // pred_region
      %505 = dma.done [#allocation4], 768
    $region53: #{tpu_custom_call.1} parent=1 // pred_fallthru
      _
    %506 = vsyncpa [#allocation3], 1
    %507 = vsyncpa [#allocation6], 1
    %508 = vsyncpa [#allocation9], 1
    %509 = vsyncpa [#allocation4], 1

</llo_original>
